<compile_context>
chip_gen: v5e
topology: v5e:2x2
jax: 0.10.0
libtpu: 0.0.40
codegen_flags: <defaults>
</compile_context>

<pallas_src>
import functools

import jax
import jax.numpy as jnp
from jax.experimental import pallas as pl
from jax.experimental.pallas import tpu as pltpu

OUT_PAD = 16    # final layer output padded to 16 lanes (block spans full last dim)
TM_ALIGN = 16   # batch-tile alignment (covers bf16 sublane packing of the output block)


def _round_up(n, m):
    return ((n + m - 1) // m) * m


def mlp_kernel(x_ref, w1, b1, w2, b2, w3, b3, w4, b4, o_ref):
    """Fused 4-layer MLP for one batch tile.

    x arrives as f32 straight from HBM (no wrapper-side cast/pad pass); it is cast to
    bf16 on the VPU for single-pass MXU matmuls with f32 accumulation; bias + ReLU run
    in f32 on the VPU; the (tm, 16) result is stored as bf16 (f32 accumulate, bf16 store).
    """
    x = x_ref[...].astype(w1.dtype)
    h = jnp.dot(x, w1[...], preferred_element_type=jnp.float32) + b1[...]
    h = jnp.maximum(h, 0.0)
    h = jnp.dot(h.astype(w2.dtype), w2[...], preferred_element_type=jnp.float32) + b2[...]
    h = jnp.maximum(h, 0.0)
    h = jnp.dot(h.astype(w3.dtype), w3[...], preferred_element_type=jnp.float32) + b3[...]
    h = jnp.maximum(h, 0.0)
    h = jnp.dot(h.astype(w4.dtype), w4[...], preferred_element_type=jnp.float32) + b4[...]
    o_ref[...] = h.astype(o_ref.dtype)


def prepare_params(params, compute_dtype=jnp.bfloat16, out_pad=OUT_PAD):
    """One-time (hoisted) weight prep: transpose nn.Linear weights to (in, out), cast to
    bf16 for the MXU, keep biases f32, and zero-pad the LAST layer's output dim to
    `out_pad` columns so the kernel's output block spans the full (contiguous) last dim."""
    prepped = []
    n = len(params)
    for i, (W, b) in enumerate(params):
        wt = W.T.astype(compute_dtype)                 # (in, out)
        bb = b.reshape(1, -1).astype(jnp.float32)      # (1, out) for lane broadcast
        if i == n - 1 and wt.shape[1] < out_pad:
            pad = out_pad - wt.shape[1]
            wt = jnp.pad(wt, ((0, 0), (0, pad)))
            bb = jnp.pad(bb, ((0, 0), (0, pad)))
        prepped.append((wt, bb))
    return prepped


@functools.partial(jax.jit, static_argnames=("out_dim", "tm_max"))
def mlp_forward(x, prepped, *, out_dim, tm_max=4096):
    """x: (batch, in_dim) f32. prepped: output of prepare_params. Returns (batch, out_dim) f32."""
    (w1, b1), (w2, b2), (w3, b3), (w4, b4) = prepped
    batch, in_dim = x.shape
    out_pad = w4.shape[1]

    # Batch tile: multiple of 16, capped at tm_max, and additionally capped at
    # ceil(batch/2) so the grid has >=2 steps whenever possible (v7x megacore).
    tm = min(tm_max, _round_up(pl.cdiv(batch, 2), TM_ALIGN))
    tm = max(TM_ALIGN, (tm // TM_ALIGN) * TM_ALIGN)
    grid = (pl.cdiv(batch, tm),)   # ragged last tile handled by Pallas edge masking

    weight_args = (w1, b1, w2, b2, w3, b3, w4, b4)

    def resident_block(a):
        # Full-array block, same index every grid step -> stays resident in VMEM.
        return pl.BlockSpec(a.shape, lambda i, _nd=a.ndim: (0,) * _nd)

    flops = 2 * batch * (
        w1.shape[0] * w1.shape[1] + w2.shape[0] * w2.shape[1]
        + w3.shape[0] * w3.shape[1] + w4.shape[0] * w4.shape[1])
    bytes_accessed = (
        x.size * x.dtype.itemsize                                  # f32 x read
        + sum(a.size * a.dtype.itemsize for a in weight_args)      # resident params
        + batch * out_pad * 2)                                     # bf16 narrow output write

    out = pl.pallas_call(
        mlp_kernel,
        out_shape=jax.ShapeDtypeStruct((batch, out_pad), jnp.bfloat16),
        grid_spec=pl.GridSpec(
            grid=grid,
            in_specs=[pl.BlockSpec((tm, in_dim), lambda i: (i, 0))]
                     + [resident_block(a) for a in weight_args],
            out_specs=pl.BlockSpec((tm, out_pad), lambda i: (i, 0)),
        ),
        compiler_params=pltpu.CompilerParams(
            dimension_semantics=("parallel",)),  # shard batch tiles across TCs (v7x megacore)
        cost_estimate=pl.CostEstimate(
            flops=flops, transcendentals=0, bytes_accessed=bytes_accessed),
    )(x, *weight_args)

    return out[:, :out_dim].astype(jnp.float32)


def reference_forward(x, params, compute_dtype=jnp.bfloat16):
    """Pure-JAX reference with the same bf16-input / f32-accumulation recipe as the kernel."""
    n = len(params)
    h = x.astype(compute_dtype)
    for i, (W, b) in enumerate(params):
        h = jnp.dot(h, W.T.astype(compute_dtype),
                    preferred_element_type=jnp.float32) + b.astype(jnp.float32)
        if i < n - 1:
            h = jnp.maximum(h, 0.0).astype(compute_dtype)
    return h


def init_params(key, in_dim, out_dim, param_m, param_k):
    """Deterministic init matching nn.Linear's default U(-1/sqrt(fan_in), 1/sqrt(fan_in))."""
    assert param_m > 1
    layer_dims = [(in_dim, param_k)]
    layer_dims += [(param_k, param_k)] * (param_m - 1)               # loop layers
    layer_dims += [(param_k, param_k // 2), (param_k // 2, out_dim)]  # head
    params = []
    for din, dout in layer_dims:
        key, kw, kb = jax.random.split(key, 3)
        bound = 1.0 / (din ** 0.5)
        W = jax.random.uniform(kw, (dout, din), jnp.float32, -bound, bound)
        b = jax.random.uniform(kb, (dout,), jnp.float32, -bound, bound)
        params.append((W, b))
    return key, params


if __name__ == "__main__":
    in_dim, out_dim, param_m, param_k = 64, 2, 2, 32

    key = jax.random.PRNGKey(0)
    key, params = init_params(key, in_dim, out_dim, param_m, param_k)
    prepped = prepare_params(params)   # hoisted one-time weight prep

    # Small-shape check (batch=8): single (ragged) grid step.
    key, kx = jax.random.split(key)
    x = jax.random.normal(kx, (8, in_dim), dtype=jnp.float32)
    out = jax.block_until_ready(mlp_forward(x, prepped, out_dim=out_dim))
    ref = reference_forward(x, params)
    assert out.shape == (8, out_dim)
    assert jnp.allclose(out, ref, atol=2e-2, rtol=2e-2), "Pallas output mismatch (batch=8)"

    # Non-multiple batch with grid > 1: exercises batch tiling, ragged last tile,
    # parallel semantics (grid = 4 with tm_max=64).
    key, kx2 = jax.random.split(key)
    x2 = jax.random.normal(kx2, (200, in_dim), dtype=jnp.float32)
    out2 = jax.block_until_ready(mlp_forward(x2, prepped, out_dim=out_dim, tm_max=64))
    ref2 = reference_forward(x2, params)
    assert out2.shape == (200, out_dim)
    assert jnp.allclose(out2, ref2, atol=2e-2, rtol=2e-2), "Pallas output mismatch (batch=200)"

    # Default tm_max path (>=2 grid steps picked automatically).
    out3 = jax.block_until_ready(mlp_forward(x2, prepped, out_dim=out_dim))
    assert jnp.allclose(out3, ref2, atol=2e-2, rtol=2e-2), "Pallas output mismatch (auto tiling)"

    print("KERNEL_OK")
</pallas_src>

<mosaic_0001>
module attributes {stable_mosaic.version = 11 : i64} {
  func.func @mlp_kernel(%arg0: i32, %arg1: memref<16x64xf32, #tpu.memory_space<vmem>>, %arg2: memref<64x32xbf16, #tpu.memory_space<vmem>>, %arg3: memref<1x32xf32, #tpu.memory_space<vmem>>, %arg4: memref<32x32xbf16, #tpu.memory_space<vmem>>, %arg5: memref<1x32xf32, #tpu.memory_space<vmem>>, %arg6: memref<32x16xbf16, #tpu.memory_space<vmem>>, %arg7: memref<1x16xf32, #tpu.memory_space<vmem>>, %arg8: memref<16x16xbf16, #tpu.memory_space<vmem>>, %arg9: memref<1x16xf32, #tpu.memory_space<vmem>>, %arg10: memref<16x16xbf16, #tpu.memory_space<vmem>>) attributes {dimension_semantics = [#tpu.dimension_semantics<parallel>], iteration_bounds = array<i64: 1>, scalar_prefetch = 0 : i64, scratch_operands = 0 : i64, tpu.core_type = #tpu.core_type<tc>, window_params = [{transform_indices = @transform_0, window_bounds = array<i64: 16, 64>}, {pipeline_mode = #tpu.pipeline_mode<synchronous>, transform_indices = @transform_1, window_bounds = array<i64: 64, 32>}, {pipeline_mode = #tpu.pipeline_mode<synchronous>, transform_indices = @transform_2, window_bounds = array<i64: 1, 32>}, {pipeline_mode = #tpu.pipeline_mode<synchronous>, transform_indices = @transform_3, window_bounds = array<i64: 32, 32>}, {pipeline_mode = #tpu.pipeline_mode<synchronous>, transform_indices = @transform_4, window_bounds = array<i64: 1, 32>}, {pipeline_mode = #tpu.pipeline_mode<synchronous>, transform_indices = @transform_5, window_bounds = array<i64: 32, 16>}, {pipeline_mode = #tpu.pipeline_mode<synchronous>, transform_indices = @transform_6, window_bounds = array<i64: 1, 16>}, {pipeline_mode = #tpu.pipeline_mode<synchronous>, transform_indices = @transform_7, window_bounds = array<i64: 16, 16>}, {pipeline_mode = #tpu.pipeline_mode<synchronous>, transform_indices = @transform_8, window_bounds = array<i64: 1, 16>}, {transform_indices = @transform_9, window_bounds = array<i64: 16, 16>}]} {
    %c0 = arith.constant 0 : index
    %c0_0 = arith.constant 0 : index
    %0 = vector.load %arg1[%c0, %c0_0] : memref<16x64xf32, #tpu.memory_space<vmem>>, vector<16x64xf32>
    %1 = arith.truncf %0 : vector<16x64xf32> to vector<16x64xbf16>
    %c0_1 = arith.constant 0 : index
    %c0_2 = arith.constant 0 : index
    %2 = vector.load %arg2[%c0_1, %c0_2] : memref<64x32xbf16, #tpu.memory_space<vmem>>, vector<64x32xbf16>
    %cst = arith.constant dense<0.000000e+00> : vector<16x32xf32>
    %3 = tpu.matmul %1, %2, %cst {dimension_numbers = #tpu.dot_dimension_numbers<[1], [0], [0], [1], [0, 0, 1, 1], [], []>} : vector<16x64xbf16>, vector<64x32xbf16>, vector<16x32xf32> -> vector<16x32xf32>
    %c0_3 = arith.constant 0 : index
    %c0_4 = arith.constant 0 : index
    %4 = vector.load %arg3[%c0_3, %c0_4] : memref<1x32xf32, #tpu.memory_space<vmem>>, vector<1x32xf32>
    %5 = vector.broadcast %4 : vector<1x32xf32> to vector<16x32xf32>
    %6 = arith.addf %3, %5 : vector<16x32xf32>
    %cst_5 = arith.constant 0.000000e+00 : f32
    %7 = vector.broadcast %cst_5 : f32 to vector<16x32xf32>
    %8 = arith.maximumf %6, %7 : vector<16x32xf32>
    %9 = arith.truncf %8 : vector<16x32xf32> to vector<16x32xbf16>
    %c0_6 = arith.constant 0 : index
    %c0_7 = arith.constant 0 : index
    %10 = vector.load %arg4[%c0_6, %c0_7] : memref<32x32xbf16, #tpu.memory_space<vmem>>, vector<32x32xbf16>
    %cst_8 = arith.constant dense<0.000000e+00> : vector<16x32xf32>
    %11 = tpu.matmul %9, %10, %cst_8 {dimension_numbers = #tpu.dot_dimension_numbers<[1], [0], [0], [1], [0, 0, 1, 1], [], []>} : vector<16x32xbf16>, vector<32x32xbf16>, vector<16x32xf32> -> vector<16x32xf32>
    %c0_9 = arith.constant 0 : index
    %c0_10 = arith.constant 0 : index
    %12 = vector.load %arg5[%c0_9, %c0_10] : memref<1x32xf32, #tpu.memory_space<vmem>>, vector<1x32xf32>
    %13 = vector.broadcast %12 : vector<1x32xf32> to vector<16x32xf32>
    %14 = arith.addf %11, %13 : vector<16x32xf32>
    %cst_11 = arith.constant 0.000000e+00 : f32
    %15 = vector.broadcast %cst_11 : f32 to vector<16x32xf32>
    %16 = arith.maximumf %14, %15 : vector<16x32xf32>
    %17 = arith.truncf %16 : vector<16x32xf32> to vector<16x32xbf16>
    %c0_12 = arith.constant 0 : index
    %c0_13 = arith.constant 0 : index
    %18 = vector.load %arg6[%c0_12, %c0_13] : memref<32x16xbf16, #tpu.memory_space<vmem>>, vector<32x16xbf16>
    %cst_14 = arith.constant dense<0.000000e+00> : vector<16x16xf32>
    %19 = tpu.matmul %17, %18, %cst_14 {dimension_numbers = #tpu.dot_dimension_numbers<[1], [0], [0], [1], [0, 0, 1, 1], [], []>} : vector<16x32xbf16>, vector<32x16xbf16>, vector<16x16xf32> -> vector<16x16xf32>
    %c0_15 = arith.constant 0 : index
    %c0_16 = arith.constant 0 : index
    %20 = vector.load %arg7[%c0_15, %c0_16] : memref<1x16xf32, #tpu.memory_space<vmem>>, vector<1x16xf32>
    %21 = vector.broadcast %20 : vector<1x16xf32> to vector<16x16xf32>
    %22 = arith.addf %19, %21 : vector<16x16xf32>
    %cst_17 = arith.constant 0.000000e+00 : f32
    %23 = vector.broadcast %cst_17 : f32 to vector<16x16xf32>
    %24 = arith.maximumf %22, %23 : vector<16x16xf32>
    %25 = arith.truncf %24 : vector<16x16xf32> to vector<16x16xbf16>
    %c0_18 = arith.constant 0 : index
    %c0_19 = arith.constant 0 : index
    %26 = vector.load %arg8[%c0_18, %c0_19] : memref<16x16xbf16, #tpu.memory_space<vmem>>, vector<16x16xbf16>
    %cst_20 = arith.constant dense<0.000000e+00> : vector<16x16xf32>
    %27 = tpu.matmul %25, %26, %cst_20 {dimension_numbers = #tpu.dot_dimension_numbers<[1], [0], [0], [1], [0, 0, 1, 1], [], []>} : vector<16x16xbf16>, vector<16x16xbf16>, vector<16x16xf32> -> vector<16x16xf32>
    %c0_21 = arith.constant 0 : index
    %c0_22 = arith.constant 0 : index
    %28 = vector.load %arg9[%c0_21, %c0_22] : memref<1x16xf32, #tpu.memory_space<vmem>>, vector<1x16xf32>
    %29 = vector.broadcast %28 : vector<1x16xf32> to vector<16x16xf32>
    %30 = arith.addf %27, %29 : vector<16x16xf32>
    %31 = arith.truncf %30 : vector<16x16xf32> to vector<16x16xbf16>
    %c0_23 = arith.constant 0 : index
    %c0_24 = arith.constant 0 : index
    %32 = vector.load %arg10[%c0_23, %c0_24] : memref<16x16xbf16, #tpu.memory_space<vmem>>, vector<16x16xbf16>
    tpu.vector_store %arg10[%c0_23, %c0_24], %31 {strides = array<i32>} : memref<16x16xbf16, #tpu.memory_space<vmem>>, vector<16x16xbf16>,
    return
  }
  func.func @transform_0(%arg0: i32) -> (i32, i32) {
    %c0_i32 = arith.constant 0 : i32
    %c0_i32_0 = arith.constant 0 : i32
    return %arg0, %c0_i32 : i32, i32
  }
  func.func @transform_1(%arg0: i32) -> (i32, i32) {
    %c0_i32 = arith.constant 0 : i32
    %c0_i32_0 = arith.constant 0 : i32
    %c0_i32_1 = arith.constant 0 : i32
    return %c0_i32, %c0_i32_0 : i32, i32
  }
  func.func @transform_2(%arg0: i32) -> (i32, i32) {
    %c0_i32 = arith.constant 0 : i32
    %c0_i32_0 = arith.constant 0 : i32
    %c0_i32_1 = arith.constant 0 : i32
    return %c0_i32, %c0_i32_0 : i32, i32
  }
  func.func @transform_3(%arg0: i32) -> (i32, i32) {
    %c0_i32 = arith.constant 0 : i32
    %c0_i32_0 = arith.constant 0 : i32
    %c0_i32_1 = arith.constant 0 : i32
    return %c0_i32, %c0_i32_0 : i32, i32
  }
  func.func @transform_4(%arg0: i32) -> (i32, i32) {
    %c0_i32 = arith.constant 0 : i32
    %c0_i32_0 = arith.constant 0 : i32
    %c0_i32_1 = arith.constant 0 : i32
    return %c0_i32, %c0_i32_0 : i32, i32
  }
  func.func @transform_5(%arg0: i32) -> (i32, i32) {
    %c0_i32 = arith.constant 0 : i32
    %c0_i32_0 = arith.constant 0 : i32
    %c0_i32_1 = arith.constant 0 : i32
    return %c0_i32, %c0_i32_0 : i32, i32
  }
  func.func @transform_6(%arg0: i32) -> (i32, i32) {
    %c0_i32 = arith.constant 0 : i32
    %c0_i32_0 = arith.constant 0 : i32
    %c0_i32_1 = arith.constant 0 : i32
    return %c0_i32, %c0_i32_0 : i32, i32
  }
  func.func @transform_7(%arg0: i32) -> (i32, i32) {
    %c0_i32 = arith.constant 0 : i32
    %c0_i32_0 = arith.constant 0 : i32
    %c0_i32_1 = arith.constant 0 : i32
    return %c0_i32, %c0_i32_0 : i32, i32
  }
  func.func @transform_8(%arg0: i32) -> (i32, i32) {
    %c0_i32 = arith.constant 0 : i32
    %c0_i32_0 = arith.constant 0 : i32
    %c0_i32_1 = arith.constant 0 : i32
    return %c0_i32, %c0_i32_0 : i32, i32
  }
  func.func @transform_9(%arg0: i32) -> (i32, i32) {
    %c0_i32 = arith.constant 0 : i32
    %c0_i32_0 = arith.constant 0 : i32
    return %arg0, %c0_i32 : i32, i32
  }
}

</mosaic_0001>

<llo_original>
// kernel: mlp_forward.1
$region0: #{mlp_forward.1}
  #allocation0 [shape = 'u32[]', space=smem, size = 0x4, offset = 0x4, fixed_abs, tag = 'smem constant byte address 0x4 - core index']
  #allocation1 [shape = 'u32[72,128]{1,0:T(1,128)}', space=vmem, size = 0x9000, scoped, tag = 'internal scratch']
  %s0 = inlined_call_operand.vmem [shape: f32[8,64], index: 0, kind: input, shape index: {}]
  %s1 = inlined_call_operand.vmem [shape: bf16[64,32], index: 1, kind: input, shape index: {}]
  %s2 = inlined_call_operand.vmem [shape: f32[1,32], index: 2, kind: input, shape index: {}]
  %s3 = inlined_call_operand.vmem [shape: bf16[32,32], index: 3, kind: input, shape index: {}]
  %s4 = inlined_call_operand.vmem [shape: f32[1,32], index: 4, kind: input, shape index: {}]
  %s5 = inlined_call_operand.vmem [shape: bf16[32,16], index: 5, kind: input, shape index: {}]
  %s6 = inlined_call_operand.vmem [shape: f32[1,16], index: 6, kind: input, shape index: {}]
  %s7 = inlined_call_operand.vmem [shape: bf16[16,16], index: 7, kind: input, shape index: {}]
  %s8 = inlined_call_operand.vmem [shape: f32[1,16], index: 8, kind: input, shape index: {}]
  %s9 = inlined_call_operand.vmem [shape: bf16[8,16], index: 9, kind: output, shape index: {}]
  %s10 = sld [smem:[#allocation0]]
  $region76: #{mlp_forward.1} parent=0
    _
  %s12 = ssub.s32 1, %s10
  %s13 = scalar_select 0, %s12, %s10
  $region1: #{mlp_forward.1} parent=0
    #allocation2 [shape = 'u8[4096]{0}', space=vmem, size = 0x1000, scoped, tag = 'output window, operand 0, single buffered']
    // Predicated region
    $region2: #{mlp_forward.1} parent=1 // pred_check
      _
    $region3: #{mlp_forward.1} parent=1 // pred_check_branch
      %15 = sbr.rel (0) target = $region5
    $region4: #{mlp_forward.1} parent=1 // pred_region
      _
    $region5: #{mlp_forward.1} parent=1 // pred_fallthru
      _
    // Predicated region
    $region6: #{mlp_forward.1} parent=1 // pred_check
      _
    $region7: #{mlp_forward.1} parent=1 // pred_check_branch
      %17 = sbr.rel (0) target = $region9
    $region8: #{mlp_forward.1} parent=1 // pred_region
      _
    $region9: #{mlp_forward.1} parent=1 // pred_fallthru
      _
    // Predicated region
    $region10: #{mlp_forward.1} parent=1 // pred_check
      _
    $region11: #{mlp_forward.1} parent=1 // pred_check_branch
      %19 = sbr.rel (0) target = $region13
    $region12: #{mlp_forward.1} parent=1 // pred_region
      _
    $region13: #{mlp_forward.1} parent=1 // pred_fallthru
      _
    // Predicated region
    $region14: #{mlp_forward.1} parent=1 // pred_check
      _
    $region15: #{mlp_forward.1} parent=1 // pred_check_branch
      %21 = sbr.rel (0) target = $region17
    $region16: #{mlp_forward.1} parent=1 // pred_region
      _
    $region17: #{mlp_forward.1} parent=1 // pred_fallthru
      _
    // Predicated region
    $region18: #{mlp_forward.1} parent=1 // pred_check
      _
    $region19: #{mlp_forward.1} parent=1 // pred_check_branch
      %23 = sbr.rel (0) target = $region21
    $region20: #{mlp_forward.1} parent=1 // pred_region
      _
    $region21: #{mlp_forward.1} parent=1 // pred_fallthru
      _
    // Predicated region
    $region22: #{mlp_forward.1} parent=1 // pred_check
      _
    $region23: #{mlp_forward.1} parent=1 // pred_check_branch
      %25 = sbr.rel (0) target = $region25
    $region24: #{mlp_forward.1} parent=1 // pred_region
      _
    $region25: #{mlp_forward.1} parent=1 // pred_fallthru
      _
    // Predicated region
    $region26: #{mlp_forward.1} parent=1 // pred_check
      _
    $region27: #{mlp_forward.1} parent=1 // pred_check_branch
      %27 = sbr.rel (0) target = $region29
    $region28: #{mlp_forward.1} parent=1 // pred_region
      _
    $region29: #{mlp_forward.1} parent=1 // pred_fallthru
      _
    // Predicated region
    $region30: #{mlp_forward.1} parent=1 // pred_check
      _
    $region31: #{mlp_forward.1} parent=1 // pred_check_branch
      %29 = sbr.rel (0) target = $region33
    $region32: #{mlp_forward.1} parent=1 // pred_region
      _
    $region33: #{mlp_forward.1} parent=1 // pred_fallthru
      _
    // Predicated region
    $region34: #{mlp_forward.1} parent=1 // pred_check
      _
    $region35: #{mlp_forward.1} parent=1 // pred_check_branch
      %31 = sbr.rel (0) target = $region37
    $region36: #{mlp_forward.1} parent=1 // pred_region
      _
    $region37: #{mlp_forward.1} parent=1 // pred_fallthru
      _
    %v33 = vld [vmem:[%s0] sm:$0xff]
    %v34 = vld [vmem:[%s0 + $0x8] sm:$0xff]
    %v35 = vpack.c.bf16 %v34, %v33
    %v36 = vld [vmem:[%s1] sm:$0xf]
    %v37 = vld [vmem:[%s1 + $0x4] sm:$0xf]
    %v38 = vld [vmem:[%s1 + $0x8] sm:$0xf]
    %v39 = vld [vmem:[%s1 + $0xc] sm:$0xf]
    %v40 = vld [vmem:[%s1 + $0x10] sm:$0xf]
    %v41 = vld [vmem:[%s1 + $0x14] sm:$0xf]
    %v42 = vld [vmem:[%s1 + $0x18] sm:$0xf]
    %v43 = vld [vmem:[%s1 + $0x1c] sm:$0xf]
    %v44 = vld [vmem:[%s2] sm:$0x1]
    %v46 = vperm.slane %v44, 0
    %v56 = vunpack.c.l.b16 %v36
    %v57 = vunpack.c.l.b16 %v37
    %v58 = vunpack.c.l.b16 %v38
    %v59 = vunpack.c.l.b16 %v39
    %v60 = vunpack.c.l.b16 %v40
    %v61 = vunpack.c.l.b16 %v41
    %v62 = vunpack.c.l.b16 %v42
    %v63 = vunpack.c.l.b16 %v43
    %v64 = vpack.c.b16 %v57, %v56
    %v65 = vpack.c.b16 %v59, %v58
    %v66 = vpack.c.b16 %v61, %v60
    %v67 = vpack.c.b16 %v63, %v62
    %vm72 = vcmask 523264
    %v74 = vsel %vm72, %v35, 0
    %76 = vmatpush.bf16.msra.mxu0 0
    %77 = vmatpush.bf16.msra.mxu0 0
    %78 = vmatpush.bf16.msra.mxu0 0
    %79 = vmatpush.bf16.msra.mxu0 0
    %80 = vmatpush.bf16.msra.mxu0 %v67
    %81 = vmatpush.bf16.msra.mxu0 %v66
    %82 = vmatpush.bf16.msra.mxu0 %v65
    %83 = vmatpush.bf16.msra.mxu0 %v64
    %84 = vmatmul.bf16.gmra.mxu0 %v74
    %v85 = vpop.f32.mrf.mxu0
    %v86 = vadd.f32 %v46, %v85
    %v87 = vpop.f32.mrf.mxu0
    %v88 = vadd.f32 %v46, %v87
    %89 = vdwg.mxu0
    %v90 = vmax.f32 %v86, 0.0
    %v91 = vmax.f32 %v88, 0.0
    %v92 = vpack.c.bf16 %v91, %v90
    %v93 = vld [vmem:[%s3] sm:$0xf]
    %v94 = vld [vmem:[%s3 + $0x4] sm:$0xf]
    %v95 = vld [vmem:[%s3 + $0x8] sm:$0xf]
    %v96 = vld [vmem:[%s3 + $0xc] sm:$0xf]
    %v97 = vld [vmem:[%s4] sm:$0x1]
    %v99 = vperm.slane %v97, 0
    %v105 = vunpack.c.l.b16 %v93
    %v106 = vunpack.c.l.b16 %v94
    %v107 = vunpack.c.l.b16 %v95
    %v108 = vunpack.c.l.b16 %v96
    %v109 = vpack.c.b16 %v106, %v105
    %v110 = vpack.c.b16 %v108, %v107
    %vm113 = vcmask 261120
    %v115 = vsel %vm113, %v92, 0
    %117 = vmatpush.bf16.msra.mxu0 0
    %118 = vmatpush.bf16.msra.mxu0 0
    %119 = vmatpush.bf16.msra.mxu0 0
    %120 = vmatpush.bf16.msra.mxu0 0
    %121 = vmatpush.bf16.msra.mxu0 0
    %122 = vmatpush.bf16.msra.mxu0 0
    %123 = vmatpush.bf16.msra.mxu0 %v110
    %124 = vmatpush.bf16.msra.mxu0 %v109
    %125 = vmatmul.bf16.gmra.mxu0 %v115
    %v126 = vpop.f32.mrf.mxu0
    %v127 = vadd.f32 %v99, %v126
    %v128 = vpop.f32.mrf.mxu0
    %v129 = vadd.f32 %v99, %v128
    %130 = vdwg.mxu0
    %v131 = vmax.f32 %v127, 0.0
    %v132 = vmax.f32 %v129, 0.0
    %v133 = vpack.c.bf16 %v132, %v131
    %v134 = vld [vmem:[%s5] sm:$0xf]
    %v135 = vld [vmem:[%s5 + $0x4] sm:$0xf]
    %v136 = vld [vmem:[%s5 + $0x8] sm:$0xf]
    %v137 = vld [vmem:[%s5 + $0xc] sm:$0xf]
    %v138 = vld [vmem:[%s6] sm:$0x1]
    %v140 = vperm.slane %v138, 0
    %v146 = vunpack.c.l.b16 %v134
    %v147 = vunpack.c.l.b16 %v135
    %v148 = vunpack.c.l.b16 %v136
    %v149 = vunpack.c.l.b16 %v137
    %v150 = vpack.c.b16 %v147, %v146
    %v151 = vpack.c.b16 %v149, %v148
    %v155 = vsel %vm113, %v133, 0
    %157 = vmatpush.bf16.msra.mxu0 0
    %158 = vmatpush.bf16.msra.mxu0 0
    %159 = vmatpush.bf16.msra.mxu0 0
    %160 = vmatpush.bf16.msra.mxu0 0
    %161 = vmatpush.bf16.msra.mxu0 0
    %162 = vmatpush.bf16.msra.mxu0 0
    %163 = vmatpush.bf16.msra.mxu0 %v151
    %164 = vmatpush.bf16.msra.mxu0 %v150
    %165 = vmatmul.bf16.gmra.mxu0 %v155
    %v166 = vpop.f32.mrf.mxu0
    %v167 = vadd.f32 %v140, %v166
    %v168 = vpop.f32.mrf.mxu0
    %v169 = vadd.f32 %v140, %v168
    %170 = vdwg.mxu0
    %v171 = vmax.f32 %v167, 0.0
    %v172 = vmax.f32 %v169, 0.0
    %v173 = vpack.c.bf16 %v172, %v171
    %v174 = vld [vmem:[%s7] sm:$0xf]
    %v175 = vld [vmem:[%s7 + $0x4] sm:$0xf]
    %v176 = vld [vmem:[%s8] sm:$0x1]
    %v178 = vperm.slane %v176, 0
    %v182 = vunpack.c.l.b16 %v174
    %v183 = vunpack.c.l.b16 %v175
    %v184 = vpack.c.b16 %v183, %v182
    %vm186 = vcmask 130048
    %v188 = vsel %vm186, %v173, 0
    %190 = vmatpush.bf16.msra.mxu0 0
    %191 = vmatpush.bf16.msra.mxu0 0
    %192 = vmatpush.bf16.msra.mxu0 0
    %193 = vmatpush.bf16.msra.mxu0 0
    %194 = vmatpush.bf16.msra.mxu0 0
    %195 = vmatpush.bf16.msra.mxu0 0
    %196 = vmatpush.bf16.msra.mxu0 0
    %197 = vmatpush.bf16.msra.mxu0 %v184
    %198 = vmatmul.bf16.gmra.mxu0 %v188
    %v199 = vpop.f32.mrf.mxu0
    %v200 = vadd.f32 %v178, %v199
    %v201 = vpop.f32.mrf.mxu0
    %v202 = vadd.f32 %v178, %v201
    %203 = vdwg.mxu0
    %v204 = vpack.c.bf16 %v200, %v200
    %v205 = vpack.c.bf16 %v202, %v202
    %vm206 = vcmask 125952
    %207 = vst.msk [vmem:[#allocation2] sm:$0xf] %vm206, %v204
    %208 = vst.msk [vmem:[#allocation2 + $0x4] sm:$0xf] %vm206, %v205
    // Predicated region
    $region38: #{mlp_forward.1} parent=1 // pred_check
      _
    $region39: #{mlp_forward.1} parent=1 // pred_check_branch
      %210 = sbr.rel (0) target = $region41
    $region40: #{mlp_forward.1} parent=1 // pred_region
      // Predicated region
      $region42: #{mlp_forward.1} parent=40 // pred_check
        _
      $region43: #{mlp_forward.1} parent=40 // pred_check_branch
        %212 = sbr.rel (0) target = $region45
      $region44: #{mlp_forward.1} parent=40 // pred_region
        // Predicated region
        $region46: #{mlp_forward.1} parent=44 // pred_check
          _
        $region47: #{mlp_forward.1} parent=44 // pred_check_branch
          %214 = sbr.rel target = $region49
        $region48: #{mlp_forward.1} parent=44 // pred_region
          // Predicated region
          $region61: #{mlp_forward.1} parent=48 // pred_check
            _
          $region62: #{mlp_forward.1} parent=48 // pred_check_branch
            %230 = sbr.rel (0) target = $region64
          $region63: #{mlp_forward.1} parent=48 // pred_region
            %s232 = ssub.s32 16, 1
            loop: start=0, step=1, limit=1
            $region65: #{mlp_forward.1} parent=63 // loop_pre_header
              _
            $region66: #{mlp_forward.1} parent=63 // loop_header
              %s234 = sphi 0, %s238
              %p235 = scmp.ge.s32.totalorder %s234, 1
              %s239 = sphi [#allocation2], [#allocation2]
              %s240 = sphi %s9, %s9
            $region67: #{mlp_forward.1} parent=63 // loop_header_branch
              %237 = sbr.rel (%p235) target = $region71
            $region68: #{mlp_forward.1} parent=63 // loop_body
              %v241 = vld [vmem:[%s239] sm:%s232]
              %242 = vst [vmem:[%s240] sm:%s232] %v241
            $region69: #{mlp_forward.1} parent=63 // loop_footer
              %s238 = sadd.s32 1, %s234
            $region70: #{mlp_forward.1} parent=63 // loop_footer_branch
              %233 = sbr.rel target = $region66
            $region71: #{mlp_forward.1} parent=63 // loop_exit
              _
          $region64: #{mlp_forward.1} parent=48 // pred_fallthru
            _
        $region49: #{mlp_forward.1} parent=44 // pred_fallthru
          _
        // Predicated region
        $region50: #{mlp_forward.1} parent=44 // pred_check
          _
        $region51: #{mlp_forward.1} parent=44 // pred_check_branch
          %216 = sbr.rel (0) target = $region53
        $region52: #{mlp_forward.1} parent=44 // pred_region
          %s218 = ssub.s32 16, 1
          loop: start=0, step=1, limit=1
          $region54: #{mlp_forward.1} parent=52 // loop_pre_header
            _
          $region55: #{mlp_forward.1} parent=52 // loop_header
            %s220 = sphi 0, %s224
            %p221 = scmp.ge.s32.totalorder %s220, 1
            %s225 = sphi [#allocation2], [#allocation2]
            %s226 = sphi %s9, %s9
          $region56: #{mlp_forward.1} parent=52 // loop_header_branch
            %223 = sbr.rel (%p221) target = $region60
          $region57: #{mlp_forward.1} parent=52 // loop_body
            %v227 = vld [vmem:[%s225] sm:%s218]
            %228 = vst [vmem:[%s226] sm:%s218] %v227
          $region58: #{mlp_forward.1} parent=52 // loop_footer
            %s224 = sadd.s32 1, %s220
          $region59: #{mlp_forward.1} parent=52 // loop_footer_branch
            %219 = sbr.rel target = $region55
          $region60: #{mlp_forward.1} parent=52 // loop_exit
            _
        $region53: #{mlp_forward.1} parent=44 // pred_fallthru
          _
      $region45: #{mlp_forward.1} parent=40 // pred_fallthru
        _
      %243 = vnop
    $region41: #{mlp_forward.1} parent=1 // pred_fallthru
      _
    // Predicated region
    $region72: #{mlp_forward.1} parent=1 // pred_check
      _
    $region73: #{mlp_forward.1} parent=1 // pred_check_branch
      %245 = sbr.rel (0) target = $region75
    $region74: #{mlp_forward.1} parent=1 // pred_region
      _
    $region75: #{mlp_forward.1} parent=1 // pred_fallthru
      _

</llo_original>
